<compile_context>
chip_gen: v7x
topology: tpu7x:2x2x1
jax: 0.10.0
libtpu: 0.0.40
codegen_flags: <defaults>
</compile_context>

<pallas_src>
import functools

import jax
import jax.numpy as jnp
from jax.experimental import pallas as pl
from jax.experimental.pallas import tpu as pltpu


_TILE_BUDGET_BYTES = 24 * 1024 * 1024   # resident weight + double-buffered tiles
_VMEM_LIMIT_BYTES = 32 * 1024 * 1024    # safe on v5e (128 MiB), v6e (128), v7x (64)
_SUBLANE_BF16 = 16                      # bf16 vregs pack (16, 128)


def _round_up(x: int, m: int) -> int:
    return (x + m - 1) // m * m


def _tm_cap(K: int, E: int, in_bytes: int, out_bytes: int) -> int:
    """Largest M-tile that keeps resident weight + double-buffered tiles in budget."""
    w_resident = 2 * K * E * in_bytes                      # conservative: 2 buffers
    per_row = 2 * K * in_bytes + 2 * E * out_bytes         # dbl-buffered in + out tile
    cap = (_TILE_BUDGET_BYTES - w_resident) // per_row
    return int(max(128, min(2048, cap)))


def _pick_tile_m(M: int, cap: int):
    """Pick tm <= cap. Prefer tm == M (single step) or a 16/8-aligned divisor of M
    so no row padding / output slice is needed. Returns (tm, padded_M)."""
    cap = min(cap, M)
    if M <= cap:
        return M, M
    for align in (_SUBLANE_BF16, 8):
        t = cap - cap % align
        while t >= align:
            if M % t == 0:
                return t, M
            t -= align
    # Rare fallback: no aligned divisor <= cap -> pad M (one extra copy + slice).
    t = max(_SUBLANE_BF16, cap - cap % _SUBLANE_BF16)
    return t, _round_up(M, t)


def _patch_embed_kernel(p_ref, w_ref, b_ref, o_ref):
    # p_ref: (tm, K) bf16, w_ref: (K, E) bf16 (resident), b_ref: (1, E) f32
    # (resident), o_ref: (tm, E).  MXU matmul, f32 accumulation, VPU bias epilogue.
    acc = jnp.dot(p_ref[...], w_ref[...], preferred_element_type=jnp.float32)
    o_ref[...] = (acc + b_ref[...]).astype(o_ref.dtype)


def _matmul_bias(patches, w, b, out_dtype):
    """patches: (M, K), w: (K, E), b: (E,). Returns (M, E) in out_dtype."""
    M, K = patches.shape
    E = w.shape[1]
    in_bytes = patches.dtype.itemsize
    out_bytes = jnp.dtype(out_dtype).itemsize

    tm, Mp = _pick_tile_m(M, _tm_cap(K, E, in_bytes, out_bytes))
    if Mp != M:
        patches = jnp.pad(patches, ((0, Mp - M), (0, 0)))

    b2 = b.astype(jnp.float32).reshape(1, E)
    grid = (Mp // tm,)

    bytes_accessed = (Mp * K * in_bytes          # patch matrix, read once
                      + K * E * in_bytes         # weight, read once (resident)
                      + E * 4                    # bias
                      + Mp * E * out_bytes)      # output writeback

    out = pl.pallas_call(
        _patch_embed_kernel,
        out_shape=jax.ShapeDtypeStruct((Mp, E), out_dtype),
        grid_spec=pltpu.PrefetchScalarGridSpec(
            num_scalar_prefetch=0,
            grid=grid,
            in_specs=[
                pl.BlockSpec((tm, K), lambda i: (i, 0)),   # streamed activations
                pl.BlockSpec((K, E), lambda i: (0, 0)),    # resident weight
                pl.BlockSpec((1, E), lambda i: (0, 0)),    # resident bias
            ],
            out_specs=pl.BlockSpec((tm, E), lambda i: (i, 0)),
        ),
        compiler_params=pltpu.CompilerParams(
            dimension_semantics=("parallel",),
            vmem_limit_bytes=_VMEM_LIMIT_BYTES),
        cost_estimate=pl.CostEstimate(
            flops=2 * Mp * E * K,
            transcendentals=0,
            bytes_accessed=bytes_accessed),
    )(patches, w, b2)

    return out[:M] if Mp != M else out


def patch_embedding_forward(x, weight, bias, patch_size=(4, 4),
                            circular_padding=False,
                            compute_dtype=jnp.bfloat16,
                            out_dtype=None):
    """x: (B, C, H, W) NCHW; weight: (E, C, ph, pw); bias: (E,).

    compute_dtype=bf16 halves DMA bytes and hits the bf16 MXU peak (f32
    accumulation); pass jnp.float32 for training-sensitive / bit-faithful paths.
    out_dtype defaults to x.dtype (module-faithful); pass jnp.bfloat16 to halve
    output writeback when downstream allows.
    """
    ph, pw = patch_size
    B, C, H, W = x.shape
    out_dtype = x.dtype if out_dtype is None else out_dtype

    # self.padding(x): faithful replica of the module's F.pad call, including
    # its ph/pw cross-wiring and its full-patch pad on an already-divisible dim
    # when only the other dim needs padding (a quirk of the PyTorch module).
    if H % ph != 0 or W % pw != 0:
        pad_w = ph - W % pw     # torch: patch_size[0] - W % patch_size[1]
        pad_h = pw - H % ph     # torch: patch_size[1] - H % patch_size[0]
        x = jnp.pad(x, ((0, 0), (0, 0), (0, pad_h), (0, pad_w)))
        B, C, H, W = x.shape

    # TODO(synk): circular_padding branch (F.pad 'circular' + (ph, 8) conv
    # kernel) is not exercised in the default config and is not implemented.
    assert not circular_padding

    Gh, Gw = H // ph, W // pw
    # Conv2d with stride == kernel drops any remainder rows/cols (VALID); slice
    # defensively so the patchify reshape is exact even for the quirky-pad case.
    if H != Gh * ph or W != Gw * pw:
        x = x[:, :, :Gh * ph, :Gw * pw]

    E = weight.shape[0]
    K = C * ph * pw
    M = B * Gh * Gw

    # im2col: bf16 cast + transpose + reshape fuse into ONE XLA copy pass under
    # jit (read f32 once, write bf16 patches once).  No K padding is needed
    # because the kernel keeps K untiled (block dim == full array dim).
    xc = x.astype(compute_dtype)
    patches = xc.reshape(B, C, Gh, ph, Gw, pw)
    patches = patches.transpose(0, 2, 4, 1, 3, 5)        # (B, Gh, Gw, C, ph, pw)
    patches = patches.reshape(M, K)

    # Conv2d weight (E, C, ph, pw) -> (K, E); the (C, ph, pw) flatten order
    # matches the patch flatten order above, so the dot reproduces torch conv.
    w_mat = weight.reshape(E, K).T.astype(compute_dtype)

    out = _matmul_bias(patches, w_mat, bias, out_dtype)   # (M, E)
    out = out.reshape(B, Gh, Gw, E)                       # == 'B C H W -> B H W C'
    # norm = Identity (norm_layer=None default)
    return out


def _reference(x, weight, bias, patch_size=(4, 4)):
    # Pure-JAX f32 reference using lax conv for verification.
    y = jax.lax.conv_general_dilated(
        x, weight, window_strides=patch_size, padding="VALID",
        dimension_numbers=("NCHW", "OIHW", "NCHW"))
    y = y + bias.reshape(1, -1, 1, 1)
    return jnp.transpose(y, (0, 2, 3, 1))


if __name__ == "__main__":
    key = jax.random.PRNGKey(0)
    k1, k2, k3, k4 = jax.random.split(key, 4)

    B, C = 2, 4
    patch_size = (4, 4)
    embed_dim = 32

    weight = jax.random.normal(k2, (embed_dim, C, *patch_size),
                               dtype=jnp.float32) * 0.05
    bias = jax.random.normal(k3, (embed_dim,), dtype=jnp.float32) * 0.05

    fwd = jax.jit(functools.partial(patch_embedding_forward,
                                    patch_size=patch_size))

    # --- Test 1: divisible H/W (padding branch is a no-op) -------------------
    H = W = 16
    x = jax.random.normal(k1, (B, C, H, W), dtype=jnp.float32)
    out = jax.block_until_ready(fwd(x, weight, bias))
    ref = _reference(x, weight, bias, patch_size)
    assert out.shape == (B, H // patch_size[0], W // patch_size[1], embed_dim)
    # bf16 inputs with f32 accumulation vs. pure-f32 reference -> loose tol.
    assert jnp.allclose(out, ref, atol=3e-2, rtol=3e-2), (
        float(jnp.max(jnp.abs(out - ref))))

    # --- Test 2: non-divisible H/W exercises the (module-faithful) pad path --
    H2 = W2 = 18
    x2 = jax.random.normal(k4, (B, C, H2, W2), dtype=jnp.float32)
    out2 = jax.block_until_ready(
        jax.jit(functools.partial(patch_embedding_forward,
                                  patch_size=patch_size))(x2, weight, bias))
    # Reference: apply the module's exact pad formula, then VALID conv.
    pad_w = patch_size[0] - W2 % patch_size[1]
    pad_h = patch_size[1] - H2 % patch_size[0]
    x2p = jnp.pad(x2, ((0, 0), (0, 0), (0, pad_h), (0, pad_w)))
    ref2 = _reference(x2p, weight, bias, patch_size)
    assert out2.shape == ref2.shape, (out2.shape, ref2.shape)
    assert jnp.allclose(out2, ref2, atol=3e-2, rtol=3e-2), (
        float(jnp.max(jnp.abs(out2 - ref2))))

    print("KERNEL_OK")
</pallas_src>

<mosaic_0001>
module attributes {stable_mosaic.version = 11 : i64} {
  func.func @_patch_embed_kernel(%arg0: i32, %arg1: memref<32x64xbf16, #tpu.memory_space<vmem>>, %arg2: memref<64x32xbf16, #tpu.memory_space<vmem>>, %arg3: memref<1x32xf32, #tpu.memory_space<vmem>>, %arg4: memref<32x32xf32, #tpu.memory_space<vmem>>) attributes {dimension_semantics = [#tpu.dimension_semantics<parallel>], iteration_bounds = array<i64: 1>, scalar_prefetch = 0 : i64, scratch_operands = 0 : i64, tpu.core_type = #tpu.core_type<tc>, window_params = [{transform_indices = @transform_0, window_bounds = array<i64: 32, 64>}, {pipeline_mode = #tpu.pipeline_mode<synchronous>, transform_indices = @transform_1, window_bounds = array<i64: 64, 32>}, {pipeline_mode = #tpu.pipeline_mode<synchronous>, transform_indices = @transform_2, window_bounds = array<i64: 1, 32>}, {transform_indices = @transform_3, window_bounds = array<i64: 32, 32>}]} {
    %c0 = arith.constant 0 : index
    %c0_0 = arith.constant 0 : index
    %0 = vector.load %arg1[%c0, %c0_0] : memref<32x64xbf16, #tpu.memory_space<vmem>>, vector<32x64xbf16>
    %c0_1 = arith.constant 0 : index
    %c0_2 = arith.constant 0 : index
    %1 = vector.load %arg2[%c0_1, %c0_2] : memref<64x32xbf16, #tpu.memory_space<vmem>>, vector<64x32xbf16>
    %cst = arith.constant dense<0.000000e+00> : vector<32x32xf32>
    %2 = tpu.matmul %0, %1, %cst {dimension_numbers = #tpu.dot_dimension_numbers<[1], [0], [0], [1], [0, 0, 1, 1], [], []>} : vector<32x64xbf16>, vector<64x32xbf16>, vector<32x32xf32> -> vector<32x32xf32>
    %c0_3 = arith.constant 0 : index
    %c0_4 = arith.constant 0 : index
    %3 = vector.load %arg3[%c0_3, %c0_4] : memref<1x32xf32, #tpu.memory_space<vmem>>, vector<1x32xf32>
    %4 = vector.broadcast %3 : vector<1x32xf32> to vector<32x32xf32>
    %5 = arith.addf %2, %4 : vector<32x32xf32>
    %c0_5 = arith.constant 0 : index
    %c0_6 = arith.constant 0 : index
    %6 = vector.load %arg4[%c0_5, %c0_6] : memref<32x32xf32, #tpu.memory_space<vmem>>, vector<32x32xf32>
    tpu.vector_store %arg4[%c0_5, %c0_6], %5 {strides = array<i32>} : memref<32x32xf32, #tpu.memory_space<vmem>>, vector<32x32xf32>,
    return
  }
  func.func @transform_0(%arg0: i32) -> (i32, i32) {
    %c0_i32 = arith.constant 0 : i32
    %c0_i32_0 = arith.constant 0 : i32
    return %arg0, %c0_i32 : i32, i32
  }
  func.func @transform_1(%arg0: i32) -> (i32, i32) {
    %c0_i32 = arith.constant 0 : i32
    %c0_i32_0 = arith.constant 0 : i32
    %c0_i32_1 = arith.constant 0 : i32
    return %c0_i32, %c0_i32_0 : i32, i32
  }
  func.func @transform_2(%arg0: i32) -> (i32, i32) {
    %c0_i32 = arith.constant 0 : i32
    %c0_i32_0 = arith.constant 0 : i32
    %c0_i32_1 = arith.constant 0 : i32
    return %c0_i32, %c0_i32_0 : i32, i32
  }
  func.func @transform_3(%arg0: i32) -> (i32, i32) {
    %c0_i32 = arith.constant 0 : i32
    %c0_i32_0 = arith.constant 0 : i32
    return %arg0, %c0_i32 : i32, i32
  }
}

</mosaic_0001>

<llo_original>
// kernel: patch_embedding_forward.1
$region0: #{patch_embedding_forward.1}
  #allocation0 [shape = 'u32[]', space=smem, size = 0x4, offset = 0x4, fixed_abs, tag = 'smem constant byte address 0x4 - core index']
  #allocation1 [shape = 'u32[144,128]{1,0:T(1,128)}', space=vmem, size = 0x12000, scoped, tag = 'internal scratch']
  %s0 = inlined_call_operand.vmem [shape: bf16[32,64], index: 0, kind: input, shape index: {}]
  %s1 = inlined_call_operand.vmem [shape: bf16[64,32], index: 1, kind: input, shape index: {}]
  %s2 = inlined_call_operand.vmem [shape: f32[1,32], index: 2, kind: input, shape index: {}]
  %s3 = inlined_call_operand.hbm [shape: f32[32,32], index: 3, kind: output, shape index: {}]
  %s4 = sld [smem:[#allocation0]]
  $region22: #{patch_embedding_forward.1} parent=0
    _
  %s6 = ssub.s32 1, %s4
  %s7 = scalar_select 0, %s6, %s4
  $region1: #{patch_embedding_forward.1} parent=0
    #allocation2 [shape = 'u8[16384]{0}', space=vmem, size = 0x4000, scoped, tag = 'output window, operand 0, single buffered']
    #allocation3 [shape = 's32[1]{0}', space=sflag, size = 0x4, scoped, tag = 'scoped memory for patch_embedding_forward.1']
    %8 = vsyncpa [#allocation3], 0
    // Predicated region
    $region2: #{patch_embedding_forward.1} parent=1 // pred_check
      _
    $region3: #{patch_embedding_forward.1} parent=1 // pred_check_branch
      %10 = sbr.rel (0) target = $region5
    $region4: #{patch_embedding_forward.1} parent=1 // pred_region
      _
    $region5: #{patch_embedding_forward.1} parent=1 // pred_fallthru
      _
    // Predicated region
    $region6: #{patch_embedding_forward.1} parent=1 // pred_check
      _
    $region7: #{patch_embedding_forward.1} parent=1 // pred_check_branch
      %12 = sbr.rel (0) target = $region9
    $region8: #{patch_embedding_forward.1} parent=1 // pred_region
      _
    $region9: #{patch_embedding_forward.1} parent=1 // pred_fallthru
      _
    // Predicated region
    $region10: #{patch_embedding_forward.1} parent=1 // pred_check
      _
    $region11: #{patch_embedding_forward.1} parent=1 // pred_check_branch
      %14 = sbr.rel (0) target = $region13
    $region12: #{patch_embedding_forward.1} parent=1 // pred_region
      _
    $region13: #{patch_embedding_forward.1} parent=1 // pred_fallthru
      _
    %v16 = vld [vmem:[%s0] sm:$0xf]
    %v17 = vld [vmem:[%s0 + $0x4] sm:$0xf]
    %v18 = vld [vmem:[%s0 + $0x8] sm:$0xf]
    %v19 = vld [vmem:[%s0 + $0xc] sm:$0xf]
    %v20 = vld [vmem:[%s1] sm:$0xf]
    %v21 = vld [vmem:[%s1 + $0x4] sm:$0xf]
    %v22 = vld [vmem:[%s1 + $0x8] sm:$0xf]
    %v23 = vld [vmem:[%s1 + $0xc] sm:$0xf]
    %v24 = vld [vmem:[%s1 + $0x10] sm:$0xf]
    %v25 = vld [vmem:[%s1 + $0x14] sm:$0xf]
    %v26 = vld [vmem:[%s1 + $0x18] sm:$0xf]
    %v27 = vld [vmem:[%s1 + $0x1c] sm:$0xf]
    %v28 = vld [vmem:[%s2] sm:$0x1]
    %v30 = vlaneseq
    %v31 = vshrl.u32 %v30, 7
    %v32 = vsub.s32 0, %v31
    %v33 = vrot.slane %v28, %v32
    %v39 = vunpack.c.l.b16 %v16
    %v40 = vunpack.c.l.b16 %v17
    %v41 = vunpack.c.l.b16 %v18
    %v42 = vunpack.c.l.b16 %v19
    %v43 = vpack.c.b16 %v40, %v39
    %v44 = vpack.c.b16 %v42, %v41
    %v53 = vunpack.c.l.b16 %v20
    %v54 = vunpack.c.l.b16 %v21
    %v55 = vunpack.c.l.b16 %v22
    %v56 = vunpack.c.l.b16 %v23
    %v57 = vunpack.c.l.b16 %v24
    %v58 = vunpack.c.l.b16 %v25
    %v59 = vunpack.c.l.b16 %v26
    %v60 = vunpack.c.l.b16 %v27
    %v61 = vpack.c.b16 %v54, %v53
    %v62 = vpack.c.b16 %v56, %v55
    %v63 = vpack.c.b16 %v58, %v57
    %v64 = vpack.c.b16 %v60, %v59
    %vm69 = vcmask 523264
    %v71 = vsel %vm69, %v43, 0
    %v74 = vsel %vm69, %v44, 0
    %76 = vmatprep.subr.bf16.mxu0 0
    %77 = vmatpush1.bf16.msra.mxu0 %v61
    %78 = vmatprep.subr.bf16.mxu0 0
    %79 = vmatpush1.bf16.msra.mxu0 %v62
    %80 = vmatprep.subr.bf16.mxu0 0
    %81 = vmatpush1.bf16.msra.mxu0 %v63
    %82 = vmatprep.subr.bf16.mxu0 0
    %83 = vmatpush1.bf16.msra.mxu0 %v64
    %84 = vmatprep.subr.bf16.mxu0 0
    %85 = vmatpush1.bf16.msra.mxu0 0
    %86 = vmatprep.subr.bf16.mxu0 0
    %87 = vmatpush1.bf16.msra.mxu0 0
    %88 = vmatprep.subr.bf16.mxu0 0
    %89 = vmatpush1.bf16.msra.mxu0 0
    %90 = vmatprep.subr.bf16.mxu0 0
    %91 = vmatpush1.bf16.msra.mxu0 0
    %92 = vmatprep.subr.bf16.mxu0 0
    %93 = vmatpush1.bf16.msra.mxu0 0
    %94 = vmatprep.subr.bf16.mxu0 0
    %95 = vmatpush1.bf16.msra.mxu0 0
    %96 = vmatprep.subr.bf16.mxu0 0
    %97 = vmatpush1.bf16.msra.mxu0 0
    %98 = vmatprep.subr.bf16.mxu0 0
    %99 = vmatpush1.bf16.msra.mxu0 0
    %100 = vmatprep.subr.bf16.mxu0 0
    %101 = vmatpush1.bf16.msra.mxu0 0
    %102 = vmatprep.subr.bf16.mxu0 0
    %103 = vmatpush1.bf16.msra.mxu0 0
    %104 = vmatprep.subr.bf16.mxu0 0
    %105 = vmatpush1.bf16.msra.mxu0 0
    %106 = vmatprep.subr.bf16.mxu0 0
    %107 = vmatpush1.bf16.msra.mxu0 0
    %108 = vmatprep.mubr.bf16.mxu0 0
    %109 = vmatmul.mubr.bf16.gmra.mrb[0].mxu0 %v71
    %v110 = vpop.f32.mrb[0].mxu0
    %v111 = vadd.f32 %v33, %v110
    %v112 = vpop.f32.mrb[0].mxu0
    %v113 = vpop.f32.mrb[0].mxu0
    %v114 = vadd.f32 %v33, %v113
    %v115 = vpop.f32.mrb[0].mxu0
    %116 = vmatprep.mubr.bf16.mxu0 0
    %117 = vmatmul.mubr.bf16.gmra.mrb[0].mxu0 %v74
    %v118 = vpop.f32.mrb[0].mxu0
    %v119 = vadd.f32 %v33, %v118
    %v120 = vpop.f32.mrb[0].mxu0
    %v121 = vpop.f32.mrb[0].mxu0
    %v122 = vadd.f32 %v33, %v121
    %v123 = vpop.f32.mrb[0].mxu0
    %124 = vdwg.mxu0
    %vm125 = vcmask 261120
    %126 = vst.msk [vmem:[#allocation2] sm:$0xff] %vm125, %v111
    %127 = vst.msk [vmem:[#allocation2 + $0x8] sm:$0xff] %vm125, %v114
    %128 = vst.msk [vmem:[#allocation2 + $0x10] sm:$0xff] %vm125, %v119
    %129 = vst.msk [vmem:[#allocation2 + $0x18] sm:$0xff] %vm125, %v122
    // Predicated region
    $region14: #{patch_embedding_forward.1} parent=1 // pred_check
      _
    $region15: #{patch_embedding_forward.1} parent=1 // pred_check_branch
      %131 = sbr.rel (0) target = $region17
    $region16: #{patch_embedding_forward.1} parent=1 // pred_region
      %s133 = ssub.s32 512, 512
      %134 = vsyncadd [#allocation3], %s133
      %s135 = sshll.u32 [#allocation2], 4
      %s136 = int_to_ptr.vmem [resolvable:$true] %s135
      %141 = dma.vmem_to_hbm [thread:$0]  %s136, 512, %s3, [#allocation3], 128, 128, 8
    $region17: #{patch_embedding_forward.1} parent=1 // pred_fallthru
      _
    // Predicated region
    $region18: #{patch_embedding_forward.1} parent=1 // pred_check
      _
    $region19: #{patch_embedding_forward.1} parent=1 // pred_check_branch
      %143 = sbr.rel (0) target = $region21
    $region20: #{patch_embedding_forward.1} parent=1 // pred_region
      %144 = dma.done [#allocation3], 512
    $region21: #{patch_embedding_forward.1} parent=1 // pred_fallthru
      _
    %145 = vsyncpa [#allocation3], 1

</llo_original>
